<compile_context>
chip_gen: v7x
topology: tpu7x:2x2x1
jax: 0.10.0
libtpu: 0.0.40
codegen_flags: <defaults>
</compile_context>

<pallas_src>
import jax
import jax.numpy as jnp
from jax.experimental import pallas as pl

# ---- model dims --------------------------------------------------------------
B = 2            # batch
C = 4            # input channels
T = 128          # sequence length (multiple of 128 -> lane-dense enc/rec stores)
H = 8            # latent / encoded channels  (>= C and >= NUM_CLASSES for packing)
NUM_CLASSES = 3


def aelc_kernel(x_ref, p_ref, cls_ref, rec_ref, enc_ref):
    """Single-invocation kernel: all B batch elements in one step.

    x_ref   : (B, C, T)  input in PyTorch NCW order (time on lanes)
    p_ref   : (H, Ncol)  packed params slab:
                cols [0, C)            W_enc (H, C)
                cols [C, C+H)          W_dec (C, H)            (rows 0..C)
                cols [C+H, C+H+NC)     W_cls^T * (1/T) (H, NC)
                col  C+H+NC            b_enc (H,)
                col  C+H+NC+1          b_dec (C,)              (rows 0..C)
                row 0, cols [C+H+NC+2, C+H+NC+2+NC)  b_cls (NC,)
    cls_ref : (B, NC)    classifier logits (lane-major row slab)
    rec_ref : (B, C, T)  reconstruction
    enc_ref : (B, H, T)  encoded features
    """
    b, c, t = x_ref.shape
    h = enc_ref.shape[1]
    nc = cls_ref.shape[1]

    we = p_ref[:, 0:c]                          # (H, C)  encoder pointwise weight
    wd = p_ref[0:c, c:c + h]                    # (C, H)  decoder pointwise weight
    wct = p_ref[:, c + h:c + h + nc]            # (H, NC) classifier weight^T * 1/T
    ob = c + h + nc
    be = p_ref[:, ob:ob + 1]                    # (H, 1)
    bd = p_ref[0:c, ob + 1:ob + 2]              # (C, 1)
    bc = p_ref[0:1, ob + 2:ob + 2 + nc]         # (1, NC) classifier bias (row)

    # encoder / decoder: pointwise convs as weight @ x; batch statically unrolled.
    for i in range(b):
        xb = x_ref[i]                                                    # (C, T)
        enc = jnp.dot(we, xb, preferred_element_type=jnp.float32) + be   # (H, T)
        enc = jnp.maximum(enc, 0.0)
        enc_ref[i] = enc
        rec_ref[i] = jnp.dot(wd, enc, preferred_element_type=jnp.float32) + bd

    # classifier: mean pool over time == lane sum (1/T already folded into wct),
    # then Linear; logits emitted as one lane-major (B, NC) slab.
    pooled = jnp.sum(enc_ref[...], axis=2)                               # (B, H)
    cls_ref[...] = jnp.dot(pooled, wct, preferred_element_type=jnp.float32) + bc


def aelc_forward(x_ncw, packed_params):
    """x_ncw: (B, C, T) float32 (PyTorch NCW). packed_params: (H, C+H+NC+2+NC) f32.

    Returns (classification (B, NC), reconstructed (B, C, T), encoded (B, H, T)).
    """
    b, c, t = x_ncw.shape
    h = packed_params.shape[0]
    nc = NUM_CLASSES

    cls, rec, enc = pl.pallas_call(
        aelc_kernel,
        grid=(1,),   # single step: whole problem fits trivially in VMEM on all gens
        out_shape=(
            jax.ShapeDtypeStruct((b, nc), jnp.float32),     # classification
            jax.ShapeDtypeStruct((b, c, t), jnp.float32),   # reconstructed (NCW)
            jax.ShapeDtypeStruct((b, h, t), jnp.float32),   # encoded (NCW)
        ),
        in_specs=[
            pl.BlockSpec((b, c, t), lambda i: (0, 0, 0)),           # x: one DMA
            pl.BlockSpec(packed_params.shape, lambda i: (0, 0)),    # params: one DMA
        ],
        out_specs=(
            pl.BlockSpec((b, nc), lambda i: (0, 0)),
            pl.BlockSpec((b, c, t), lambda i: (0, 0, 0)),
            pl.BlockSpec((b, h, t), lambda i: (0, 0, 0)),
        ),
    )(x_ncw, packed_params)
    return cls, rec, enc


def init_params(key):
    """Native PyTorch layouts: Conv1d(C->H,1).weight (H,C), Conv1d(H->C,1).weight (C,H),
    Linear(H->NC).weight (NC,H), plus the three bias vectors."""
    assert H >= C and H >= NUM_CLASSES
    k = jax.random.split(key, 6)
    w_enc = jax.random.normal(k[0], (H, C), jnp.float32) * 0.1
    w_dec = jax.random.normal(k[1], (C, H), jnp.float32) * 0.1
    w_cls = jax.random.normal(k[2], (NUM_CLASSES, H), jnp.float32) * 0.1
    b_enc = jax.random.normal(k[3], (H,), jnp.float32) * 0.1
    b_dec = jax.random.normal(k[4], (C,), jnp.float32) * 0.1
    b_cls = jax.random.normal(k[5], (NUM_CLASSES,), jnp.float32) * 0.1
    return w_enc, w_dec, w_cls, b_enc, b_dec, b_cls


def pack_params(params, t):
    """One-time packing of all weights/biases into a single (H, 20) VMEM slab.
    The 1/T mean-pool scale is folded into the classifier weight here."""
    w_enc, w_dec, w_cls, b_enc, b_dec, b_cls = params
    h, c = w_enc.shape
    nc = w_cls.shape[0]
    ncols = c + h + nc + 2 + nc
    p = jnp.zeros((h, ncols), jnp.float32)
    p = p.at[:, 0:c].set(w_enc)
    p = p.at[0:c, c:c + h].set(w_dec)
    p = p.at[:, c + h:c + h + nc].set(w_cls.T * (1.0 / t))
    p = p.at[:, c + h + nc].set(b_enc)
    p = p.at[0:c, c + h + nc + 1].set(b_dec)
    p = p.at[0, c + h + nc + 2:c + h + nc + 2 + nc].set(b_cls)
    return p


def aelc_reference(x_ncw, params):
    """Pure-JAX reference for correctness check (natural param layouts)."""
    w_enc, w_dec, w_cls, b_enc, b_dec, b_cls = params
    enc = jnp.maximum(jnp.einsum('hc,bct->bht', w_enc, x_ncw) + b_enc[None, :, None], 0.0)
    rec = jnp.einsum('ch,bht->bct', w_dec, enc) + b_dec[None, :, None]
    pooled = enc.mean(axis=2)                        # (B, H)
    cls = pooled @ w_cls.T + b_cls[None, :]
    return cls, rec, enc


if __name__ == "__main__":
    key = jax.random.PRNGKey(0)
    kx, kp = jax.random.split(key)
    x = jax.random.normal(kx, (B, C, T), jnp.float32)
    params = init_params(kp)
    packed = pack_params(params, T)                  # one-time, outside the hot path

    cls, rec, enc = jax.block_until_ready(aelc_forward(x, packed))

    cls_r, rec_r, enc_r = aelc_reference(x, params)
    assert cls.shape == (B, NUM_CLASSES)
    assert rec.shape == (B, C, T)
    assert enc.shape == (B, H, T)
    assert jnp.allclose(cls, cls_r, atol=1e-5)
    assert jnp.allclose(rec, rec_r, atol=1e-5)
    assert jnp.allclose(enc, enc_r, atol=1e-5)

    print("KERNEL_OK")
</pallas_src>

<mosaic_0001>
module attributes {stable_mosaic.version = 11 : i64} {
  func.func @aelc_kernel(%arg0: i32, %arg1: memref<2x4x128xf32, #tpu.memory_space<vmem>>, %arg2: memref<8x20xf32, #tpu.memory_space<vmem>>, %arg3: memref<2x3xf32, #tpu.memory_space<vmem>>, %arg4: memref<2x4x128xf32, #tpu.memory_space<vmem>>, %arg5: memref<2x8x128xf32, #tpu.memory_space<vmem>>) attributes {dimension_semantics = [#tpu.dimension_semantics<arbitrary>], iteration_bounds = array<i64: 1>, scalar_prefetch = 0 : i64, scratch_operands = 0 : i64, tpu.core_type = #tpu.core_type<tc>, window_params = [{pipeline_mode = #tpu.pipeline_mode<synchronous>, transform_indices = @transform_0, window_bounds = array<i64: 2, 4, 128>}, {pipeline_mode = #tpu.pipeline_mode<synchronous>, transform_indices = @transform_1, window_bounds = array<i64: 8, 20>}, {pipeline_mode = #tpu.pipeline_mode<synchronous>, transform_indices = @transform_2, window_bounds = array<i64: 2, 3>}, {pipeline_mode = #tpu.pipeline_mode<synchronous>, transform_indices = @transform_3, window_bounds = array<i64: 2, 4, 128>}, {pipeline_mode = #tpu.pipeline_mode<synchronous>, transform_indices = @transform_4, window_bounds = array<i64: 2, 8, 128>}]} {
    %c0 = arith.constant 0 : index
    %c0_0 = arith.constant 0 : index
    %0 = vector.load %arg2[%c0, %c0_0] : memref<8x20xf32, #tpu.memory_space<vmem>>, vector<8x4xf32>
    %c0_1 = arith.constant 0 : index
    %c4 = arith.constant 4 : index
    %1 = vector.load %arg2[%c0_1, %c4] : memref<8x20xf32, #tpu.memory_space<vmem>>, vector<4x8xf32>
    %c0_2 = arith.constant 0 : index
    %c12 = arith.constant 12 : index
    %2 = vector.load %arg2[%c0_2, %c12] : memref<8x20xf32, #tpu.memory_space<vmem>>, vector<8x3xf32>
    %c0_3 = arith.constant 0 : index
    %c15 = arith.constant 15 : index
    %3 = vector.load %arg2[%c0_3, %c15] : memref<8x20xf32, #tpu.memory_space<vmem>>, vector<8x1xf32>
    %c0_4 = arith.constant 0 : index
    %c16 = arith.constant 16 : index
    %4 = vector.load %arg2[%c0_4, %c16] : memref<8x20xf32, #tpu.memory_space<vmem>>, vector<4x1xf32>
    %c0_5 = arith.constant 0 : index
    %c17 = arith.constant 17 : index
    %5 = vector.load %arg2[%c0_5, %c17] : memref<8x20xf32, #tpu.memory_space<vmem>>, vector<1x3xf32>
    %c0_6 = arith.constant 0 : index
    %c0_7 = arith.constant 0 : index
    %c0_8 = arith.constant 0 : index
    %6 = vector.load %arg1[%c0_6, %c0_7, %c0_8] : memref<2x4x128xf32, #tpu.memory_space<vmem>>, vector<1x4x128xf32>
    %7 = vector.shape_cast %6 : vector<1x4x128xf32> to vector<4x128xf32>
    %cst = arith.constant dense<0.000000e+00> : vector<8x128xf32>
    %8 = tpu.matmul %0, %7, %cst {dimension_numbers = #tpu.dot_dimension_numbers<[1], [0], [0], [1], [0, 0, 1, 1], [], []>} : vector<8x4xf32>, vector<4x128xf32>, vector<8x128xf32> -> vector<8x128xf32>
    %9 = vector.broadcast %3 : vector<8x1xf32> to vector<8x128xf32>
    %10 = arith.addf %8, %9 : vector<8x128xf32>
    %cst_9 = arith.constant 0.000000e+00 : f32
    %11 = vector.broadcast %cst_9 : f32 to vector<8x128xf32>
    %12 = arith.maximumf %10, %11 : vector<8x128xf32>
    %c0_10 = arith.constant 0 : index
    %c0_11 = arith.constant 0 : index
    %c0_12 = arith.constant 0 : index
    %13 = vector.load %arg5[%c0_10, %c0_11, %c0_12] : memref<2x8x128xf32, #tpu.memory_space<vmem>>, vector<1x8x128xf32>
    %14 = vector.shape_cast %13 : vector<1x8x128xf32> to vector<8x128xf32>
    %15 = vector.shape_cast %12 : vector<8x128xf32> to vector<1x8x128xf32>
    tpu.vector_store %arg5[%c0_10, %c0_11, %c0_12], %15 {strides = array<i32>} : memref<2x8x128xf32, #tpu.memory_space<vmem>>, vector<1x8x128xf32>,
    %cst_13 = arith.constant dense<0.000000e+00> : vector<4x128xf32>
    %16 = tpu.matmul %1, %12, %cst_13 {dimension_numbers = #tpu.dot_dimension_numbers<[1], [0], [0], [1], [0, 0, 1, 1], [], []>} : vector<4x8xf32>, vector<8x128xf32>, vector<4x128xf32> -> vector<4x128xf32>
    %17 = vector.broadcast %4 : vector<4x1xf32> to vector<4x128xf32>
    %18 = arith.addf %16, %17 : vector<4x128xf32>
    %c0_14 = arith.constant 0 : index
    %c0_15 = arith.constant 0 : index
    %c0_16 = arith.constant 0 : index
    %19 = vector.load %arg4[%c0_14, %c0_15, %c0_16] : memref<2x4x128xf32, #tpu.memory_space<vmem>>, vector<1x4x128xf32>
    %20 = vector.shape_cast %19 : vector<1x4x128xf32> to vector<4x128xf32>
    %21 = vector.shape_cast %18 : vector<4x128xf32> to vector<1x4x128xf32>
    tpu.vector_store %arg4[%c0_14, %c0_15, %c0_16], %21 {strides = array<i32>} : memref<2x4x128xf32, #tpu.memory_space<vmem>>, vector<1x4x128xf32>,
    %c1 = arith.constant 1 : index
    %c0_17 = arith.constant 0 : index
    %c0_18 = arith.constant 0 : index
    %22 = vector.load %arg1[%c1, %c0_17, %c0_18] : memref<2x4x128xf32, #tpu.memory_space<vmem>>, vector<1x4x128xf32>
    %23 = vector.shape_cast %22 : vector<1x4x128xf32> to vector<4x128xf32>
    %cst_19 = arith.constant dense<0.000000e+00> : vector<8x128xf32>
    %24 = tpu.matmul %0, %23, %cst_19 {dimension_numbers = #tpu.dot_dimension_numbers<[1], [0], [0], [1], [0, 0, 1, 1], [], []>} : vector<8x4xf32>, vector<4x128xf32>, vector<8x128xf32> -> vector<8x128xf32>
    %25 = vector.broadcast %3 : vector<8x1xf32> to vector<8x128xf32>
    %26 = arith.addf %24, %25 : vector<8x128xf32>
    %cst_20 = arith.constant 0.000000e+00 : f32
    %27 = vector.broadcast %cst_20 : f32 to vector<8x128xf32>
    %28 = arith.maximumf %26, %27 : vector<8x128xf32>
    %c1_21 = arith.constant 1 : index
    %c0_22 = arith.constant 0 : index
    %c0_23 = arith.constant 0 : index
    %29 = vector.load %arg5[%c1_21, %c0_22, %c0_23] : memref<2x8x128xf32, #tpu.memory_space<vmem>>, vector<1x8x128xf32>
    %30 = vector.shape_cast %29 : vector<1x8x128xf32> to vector<8x128xf32>
    %31 = vector.shape_cast %28 : vector<8x128xf32> to vector<1x8x128xf32>
    tpu.vector_store %arg5[%c1_21, %c0_22, %c0_23], %31 {strides = array<i32>} : memref<2x8x128xf32, #tpu.memory_space<vmem>>, vector<1x8x128xf32>,
    %cst_24 = arith.constant dense<0.000000e+00> : vector<4x128xf32>
    %32 = tpu.matmul %1, %28, %cst_24 {dimension_numbers = #tpu.dot_dimension_numbers<[1], [0], [0], [1], [0, 0, 1, 1], [], []>} : vector<4x8xf32>, vector<8x128xf32>, vector<4x128xf32> -> vector<4x128xf32>
    %33 = vector.broadcast %4 : vector<4x1xf32> to vector<4x128xf32>
    %34 = arith.addf %32, %33 : vector<4x128xf32>
    %c1_25 = arith.constant 1 : index
    %c0_26 = arith.constant 0 : index
    %c0_27 = arith.constant 0 : index
    %35 = vector.load %arg4[%c1_25, %c0_26, %c0_27] : memref<2x4x128xf32, #tpu.memory_space<vmem>>, vector<1x4x128xf32>
    %36 = vector.shape_cast %35 : vector<1x4x128xf32> to vector<4x128xf32>
    %37 = vector.shape_cast %34 : vector<4x128xf32> to vector<1x4x128xf32>
    tpu.vector_store %arg4[%c1_25, %c0_26, %c0_27], %37 {strides = array<i32>} : memref<2x4x128xf32, #tpu.memory_space<vmem>>, vector<1x4x128xf32>,
    %c0_28 = arith.constant 0 : index
    %c0_29 = arith.constant 0 : index
    %c0_30 = arith.constant 0 : index
    %38 = vector.load %arg5[%c0_28, %c0_29, %c0_30] : memref<2x8x128xf32, #tpu.memory_space<vmem>>, vector<2x8x128xf32>
    %cst_31 = arith.constant dense<0.000000e+00> : vector<2x8xf32>
    %39 = vector.multi_reduction <add>, %38, %cst_31 [2] : vector<2x8x128xf32> to vector<2x8xf32>
    %cst_32 = arith.constant dense<0.000000e+00> : vector<2x3xf32>
    %40 = tpu.matmul %39, %2, %cst_32 {dimension_numbers = #tpu.dot_dimension_numbers<[1], [0], [0], [1], [0, 0, 1, 1], [], []>} : vector<2x8xf32>, vector<8x3xf32>, vector<2x3xf32> -> vector<2x3xf32>
    %41 = vector.broadcast %5 : vector<1x3xf32> to vector<2x3xf32>
    %42 = arith.addf %40, %41 : vector<2x3xf32>
    %c0_33 = arith.constant 0 : index
    %c0_34 = arith.constant 0 : index
    %43 = vector.load %arg3[%c0_33, %c0_34] : memref<2x3xf32, #tpu.memory_space<vmem>>, vector<2x3xf32>
    tpu.vector_store %arg3[%c0_33, %c0_34], %42 {strides = array<i32>} : memref<2x3xf32, #tpu.memory_space<vmem>>, vector<2x3xf32>,
    return
  }
  func.func @transform_0(%arg0: i32) -> (i32, i32, i32) {
    %c0_i32 = arith.constant 0 : i32
    %c0_i32_0 = arith.constant 0 : i32
    %c0_i32_1 = arith.constant 0 : i32
    %c0_i32_2 = arith.constant 0 : i32
    return %c0_i32, %c0_i32_0, %c0_i32_1 : i32, i32, i32
  }
  func.func @transform_1(%arg0: i32) -> (i32, i32) {
    %c0_i32 = arith.constant 0 : i32
    %c0_i32_0 = arith.constant 0 : i32
    %c0_i32_1 = arith.constant 0 : i32
    return %c0_i32, %c0_i32_0 : i32, i32
  }
  func.func @transform_2(%arg0: i32) -> (i32, i32) {
    %c0_i32 = arith.constant 0 : i32
    %c0_i32_0 = arith.constant 0 : i32
    %c0_i32_1 = arith.constant 0 : i32
    return %c0_i32, %c0_i32_0 : i32, i32
  }
  func.func @transform_3(%arg0: i32) -> (i32, i32, i32) {
    %c0_i32 = arith.constant 0 : i32
    %c0_i32_0 = arith.constant 0 : i32
    %c0_i32_1 = arith.constant 0 : i32
    %c0_i32_2 = arith.constant 0 : i32
    return %c0_i32, %c0_i32_0, %c0_i32_1 : i32, i32, i32
  }
  func.func @transform_4(%arg0: i32) -> (i32, i32, i32) {
    %c0_i32 = arith.constant 0 : i32
    %c0_i32_0 = arith.constant 0 : i32
    %c0_i32_1 = arith.constant 0 : i32
    %c0_i32_2 = arith.constant 0 : i32
    return %c0_i32, %c0_i32_0, %c0_i32_1 : i32, i32, i32
  }
}

</mosaic_0001>

<llo_original>
// kernel: tpu_custom_call.1
$region0: #{tpu_custom_call.1}
  #allocation0 [shape = 'u32[]', space=smem, size = 0x4, offset = 0x4, fixed_abs, tag = 'smem constant byte address 0x4 - core index']
  #allocation1 [shape = 'u32[144,128]{1,0:T(1,128)}', space=vmem, size = 0x12000, scoped, tag = 'internal scratch']
  %s0 = inlined_call_operand.hbm [shape: f32[2,4,128], index: 0, kind: input, shape index: {}]
  %s1 = inlined_call_operand.hbm [shape: f32[8,20], index: 1, kind: input, shape index: {}]
  %s2 = inlined_call_operand.hbm [shape: f32[2,3], index: 2, kind: output, shape index: {0}]
  %s3 = inlined_call_operand.hbm [shape: f32[2,4,128], index: 3, kind: output, shape index: {1}]
  %s4 = inlined_call_operand.hbm [shape: f32[2,8,128], index: 4, kind: output, shape index: {2}]
  %5 = xla_tuple %s2, %s3, %s4
  %s6 = sld [smem:[#allocation0]]
  $region42: #{tpu_custom_call.1} parent=0
    _
  %s8 = ssub.s32 1, %s6
  %s9 = scalar_select 0, %s8, %s6
  $region1: #{tpu_custom_call.1} parent=0
    #allocation2 [shape = 'u8[4096]{0}', space=vmem, size = 0x1000, scoped, tag = 'input window, operand 0, single buffered']
    #allocation3 [shape = 's32[1]{0}', space=sflag, size = 0x4, scoped, tag = 'scoped memory for tpu_custom_call.1']
    #allocation4 [shape = 's32[1]{0}', space=sflag, size = 0x4, scoped, tag = 'scoped memory for tpu_custom_call.1']
    #allocation5 [shape = 'u8[4096]{0}', space=vmem, size = 0x1000, scoped, tag = 'input window, operand 1, single buffered']
    #allocation6 [shape = 's32[1]{0}', space=sflag, size = 0x4, scoped, tag = 'scoped memory for tpu_custom_call.1']
    #allocation7 [shape = 'u8[1024]{0}', space=vmem, size = 0x400, scoped, tag = 'output window, operand 0, single buffered']
    #allocation8 [shape = 'u8[4096]{0}', space=vmem, size = 0x1000, scoped, tag = 'output window, operand 1, single buffered']
    #allocation9 [shape = 's32[1]{0}', space=sflag, size = 0x4, scoped, tag = 'scoped memory for tpu_custom_call.1']
    #allocation10 [shape = 'u8[8192]{0}', space=vmem, size = 0x2000, scoped, tag = 'output window, operand 2, single buffered']
    %10 = vsyncpa [#allocation3], 0
    %11 = vsyncpa [#allocation6], 0
    %12 = vsyncpa [#allocation4], 0
    %13 = vsyncpa [#allocation9], 0
    // Predicated region
    $region2: #{tpu_custom_call.1} parent=1 // pred_check
      _
    $region3: #{tpu_custom_call.1} parent=1 // pred_check_branch
      %15 = sbr.rel (0) target = $region5
    $region4: #{tpu_custom_call.1} parent=1 // pred_region
      %s17 = ssub.s32 128, 128
      %18 = vsyncadd [#allocation3], %s17
      %s19 = sshll.u32 [#allocation2], 4
      %s20 = int_to_ptr.vmem [resolvable:$true] %s19
      %25 = dma.hbm_to_vmem [thread:$0]  %s0, 128, %s20, [#allocation3], 64, 64, 4
    $region5: #{tpu_custom_call.1} parent=1 // pred_fallthru
      _
    // Predicated region
    $region6: #{tpu_custom_call.1} parent=1 // pred_check
      _
    $region7: #{tpu_custom_call.1} parent=1 // pred_check_branch
      %27 = sbr.rel (0) target = $region9
    $region8: #{tpu_custom_call.1} parent=1 // pred_region
      %s29 = ssub.s32 128, 128
      %30 = vsyncadd [#allocation6], %s29
      %s32 = sshll.u32 [#allocation5], 4
      %s33 = int_to_ptr.vmem [resolvable:$true] %s32
      %35 = dma.hbm_to_vmem [thread:$0]  %s1, 128, %s33, [#allocation6]
    $region9: #{tpu_custom_call.1} parent=1 // pred_fallthru
      _
    // Predicated region
    $region10: #{tpu_custom_call.1} parent=1 // pred_check
      _
    $region11: #{tpu_custom_call.1} parent=1 // pred_check_branch
      %37 = sbr.rel (0) target = $region13
    $region12: #{tpu_custom_call.1} parent=1 // pred_region
      %38 = dma.done [#allocation3], 128
    $region13: #{tpu_custom_call.1} parent=1 // pred_fallthru
      _
    // Predicated region
    $region14: #{tpu_custom_call.1} parent=1 // pred_check
      _
    $region15: #{tpu_custom_call.1} parent=1 // pred_check_branch
      %40 = sbr.rel (0) target = $region17
    $region16: #{tpu_custom_call.1} parent=1 // pred_region
      %41 = dma.done [#allocation6], 128
    $region17: #{tpu_custom_call.1} parent=1 // pred_fallthru
      _
    %v42 = vld [vmem:[#allocation5] sm:$0xff]
    %v43 = vld [vmem:[#allocation5] sm:$0xf]
    %v44 = vld [vmem:[#allocation5] sm:$0x1]
    %v45 = vld [vmem:[#allocation2] sm:$0xf]
    %47 = vset.pattern.permute.xlu0 15
    %48 = vperm.xlu0 %47, %v42
    %v49 = vpop.permute.xlu0 %48
    %vm51 = vcmask 31744
    %v52 = vsel %vm51, %v42, 0
    %vm54 = vcmask 1043456
    %v56 = vsel %vm54, %v45, 0
    %58 = vmatprep.subr.mxu0 0.0
    %59 = vmatpush1.msra.mxu0 %v56
    %60 = vmatprep.subr.mxu0 0.0
    %61 = vmatpush1.msra.mxu0 0.0
    %62 = vmatprep.subr.mxu0 0.0
    %63 = vmatpush1.msra.mxu0 0.0
    %64 = vmatprep.subr.mxu0 0.0
    %65 = vmatpush1.msra.mxu0 0.0
    %66 = vmatprep.subr.mxu0 0.0
    %67 = vmatpush1.msra.mxu0 0.0
    %68 = vmatprep.subr.mxu0 0.0
    %69 = vmatpush1.msra.mxu0 0.0
    %70 = vmatprep.subr.mxu0 0.0
    %71 = vmatpush1.msra.mxu0 0.0
    %72 = vmatprep.subr.mxu0 0.0
    %73 = vmatpush1.msra.mxu0 0.0
    %74 = vmatprep.subr.mxu0 0.0
    %75 = vmatpush1.msra.mxu0 0.0
    %76 = vmatprep.subr.mxu0 0.0
    %77 = vmatpush1.msra.mxu0 0.0
    %78 = vmatprep.subr.mxu0 0.0
    %79 = vmatpush1.msra.mxu0 0.0
    %80 = vmatprep.subr.mxu0 0.0
    %81 = vmatpush1.msra.mxu0 0.0
    %82 = vmatprep.subr.mxu0 0.0
    %83 = vmatpush1.msra.mxu0 0.0
    %84 = vmatprep.subr.mxu0 0.0
    %85 = vmatpush1.msra.mxu0 0.0
    %86 = vmatprep.subr.mxu0 0.0
    %87 = vmatpush1.msra.mxu0 0.0
    %88 = vmatprep.subr.mxu0 0.0
    %89 = vmatpush1.msra.mxu0 0.0
    %90 = vmatprep.subr.mxu0 0.0
    %91 = vmatpush1.msra.mxu0 0.0
    %92 = vmatprep.subr.mxu0 0.0
    %93 = vmatpush1.msra.mxu0 0.0
    %94 = vmatprep.subr.mxu0 0.0
    %95 = vmatpush1.msra.mxu0 0.0
    %96 = vmatprep.subr.mxu0 0.0
    %97 = vmatpush1.msra.mxu0 0.0
    %98 = vmatprep.subr.mxu0 0.0
    %99 = vmatpush1.msra.mxu0 0.0
    %100 = vmatprep.subr.mxu0 0.0
    %101 = vmatpush1.msra.mxu0 0.0
    %102 = vmatprep.subr.mxu0 0.0
    %103 = vmatpush1.msra.mxu0 0.0
    %104 = vmatprep.subr.mxu0 0.0
    %105 = vmatpush1.msra.mxu0 0.0
    %106 = vmatprep.subr.mxu0 0.0
    %107 = vmatpush1.msra.mxu0 0.0
    %108 = vmatprep.subr.mxu0 0.0
    %109 = vmatpush1.msra.mxu0 0.0
    %110 = vmatprep.subr.mxu0 0.0
    %111 = vmatpush1.msra.mxu0 0.0
    %112 = vmatprep.subr.mxu0 0.0
    %113 = vmatpush1.msra.mxu0 0.0
    %114 = vmatprep.subr.mxu0 0.0
    %115 = vmatpush1.msra.mxu0 0.0
    %116 = vmatprep.subr.mxu0 0.0
    %117 = vmatpush1.msra.mxu0 0.0
    %118 = vmatprep.subr.mxu0 0.0
    %119 = vmatpush1.msra.mxu0 0.0
    %120 = vmatprep.subr.mxu0 0.0
    %121 = vmatpush1.msra.mxu0 0.0
    %122 = vmatprep.mubr.f32.mxu0 0.0
    %123 = vmatmul.mubr.f32.gmra.mrb[0].mxu0 %v52
    %v124 = vpop.f32.mrb[0].mxu0
    %v125 = vadd.f32 %v49, %v124
    %v126 = vpop.f32.mrb[0].mxu0
    %127 = vdwg.mxu0
    %v128 = vmax.f32 %v125, 0.0
    %129 = vst [vmem:[#allocation10] sm:$0xff] %v128
    %131 = vset.pattern.permute.xlu0 16
    %132 = vperm.xlu0 %131, %v43
    %v133 = vpop.permute.xlu0 %132
    %135 = vrot.lane.b32.xlu0 %v43, 124
    %v136 = vpop.permute.xlu0 %135
    %vm137 = vcmask 64512
    %v138 = vsel %vm137, %v136, 0
    %140 = vmatprep.subr.mxu0 0.0
    %141 = vmatpush1.msra.mxu0 %v128
    %142 = vmatprep.subr.mxu0 0.0
    %143 = vmatpush1.msra.mxu0 0.0
    %144 = vmatprep.subr.mxu0 0.0
    %145 = vmatpush1.msra.mxu0 0.0
    %146 = vmatprep.subr.mxu0 0.0
    %147 = vmatpush1.msra.mxu0 0.0
    %148 = vmatprep.subr.mxu0 0.0
    %149 = vmatpush1.msra.mxu0 0.0
    %150 = vmatprep.subr.mxu0 0.0
    %151 = vmatpush1.msra.mxu0 0.0
    %152 = vmatprep.subr.mxu0 0.0
    %153 = vmatpush1.msra.mxu0 0.0
    %154 = vmatprep.subr.mxu0 0.0
    %155 = vmatpush1.msra.mxu0 0.0
    %156 = vmatprep.subr.mxu0 0.0
    %157 = vmatpush1.msra.mxu0 0.0
    %158 = vmatprep.subr.mxu0 0.0
    %159 = vmatpush1.msra.mxu0 0.0
    %160 = vmatprep.subr.mxu0 0.0
    %161 = vmatpush1.msra.mxu0 0.0
    %162 = vmatprep.subr.mxu0 0.0
    %163 = vmatpush1.msra.mxu0 0.0
    %164 = vmatprep.subr.mxu0 0.0
    %165 = vmatpush1.msra.mxu0 0.0
    %166 = vmatprep.subr.mxu0 0.0
    %167 = vmatpush1.msra.mxu0 0.0
    %168 = vmatprep.subr.mxu0 0.0
    %169 = vmatpush1.msra.mxu0 0.0
    %170 = vmatprep.subr.mxu0 0.0
    %171 = vmatpush1.msra.mxu0 0.0
    %172 = vmatprep.subr.mxu0 0.0
    %173 = vmatpush1.msra.mxu0 0.0
    %174 = vmatprep.subr.mxu0 0.0
    %175 = vmatpush1.msra.mxu0 0.0
    %176 = vmatprep.subr.mxu0 0.0
    %177 = vmatpush1.msra.mxu0 0.0
    %178 = vmatprep.subr.mxu0 0.0
    %179 = vmatpush1.msra.mxu0 0.0
    %180 = vmatprep.subr.mxu0 0.0
    %181 = vmatpush1.msra.mxu0 0.0
    %182 = vmatprep.subr.mxu0 0.0
    %183 = vmatpush1.msra.mxu0 0.0
    %184 = vmatprep.subr.mxu0 0.0
    %185 = vmatpush1.msra.mxu0 0.0
    %186 = vmatprep.subr.mxu0 0.0
    %187 = vmatpush1.msra.mxu0 0.0
    %188 = vmatprep.subr.mxu0 0.0
    %189 = vmatpush1.msra.mxu0 0.0
    %190 = vmatprep.subr.mxu0 0.0
    %191 = vmatpush1.msra.mxu0 0.0
    %192 = vmatprep.subr.mxu0 0.0
    %193 = vmatpush1.msra.mxu0 0.0
    %194 = vmatprep.subr.mxu0 0.0
    %195 = vmatpush1.msra.mxu0 0.0
    %196 = vmatprep.subr.mxu0 0.0
    %197 = vmatpush1.msra.mxu0 0.0
    %198 = vmatprep.subr.mxu0 0.0
    %199 = vmatpush1.msra.mxu0 0.0
    %200 = vmatprep.subr.mxu0 0.0
    %201 = vmatpush1.msra.mxu0 0.0
    %202 = vmatprep.subr.mxu0 0.0
    %203 = vmatpush1.msra.mxu0 0.0
    %204 = vmatprep.mubr.f32.mxu0 0.0
    %205 = vmatmul.mubr.f32.gmra.mrb[0].mxu0 %v138
    %v206 = vpop.f32.mrb[0].mxu0
    %v207 = vadd.f32 %v133, %v206
    %v208 = vpop.f32.mrb[0].mxu0
    %209 = vdwg.mxu0
    %210 = vst [vmem:[#allocation8] sm:$0xf] %v207
    %s211 = scalar_lea.vmem [#allocation2], 4
    %v212 = vld [vmem:[%s211] sm:$0xf]
    %v214 = vsel %vm54, %v212, 0
    %216 = vmatprep.subr.mxu0 0.0
    %217 = vmatpush1.msra.mxu0 %v214
    %218 = vmatprep.subr.mxu0 0.0
    %219 = vmatpush1.msra.mxu0 0.0
    %220 = vmatprep.subr.mxu0 0.0
    %221 = vmatpush1.msra.mxu0 0.0
    %222 = vmatprep.subr.mxu0 0.0
    %223 = vmatpush1.msra.mxu0 0.0
    %224 = vmatprep.subr.mxu0 0.0
    %225 = vmatpush1.msra.mxu0 0.0
    %226 = vmatprep.subr.mxu0 0.0
    %227 = vmatpush1.msra.mxu0 0.0
    %228 = vmatprep.subr.mxu0 0.0
    %229 = vmatpush1.msra.mxu0 0.0
    %230 = vmatprep.subr.mxu0 0.0
    %231 = vmatpush1.msra.mxu0 0.0
    %232 = vmatprep.subr.mxu0 0.0
    %233 = vmatpush1.msra.mxu0 0.0
    %234 = vmatprep.subr.mxu0 0.0
    %235 = vmatpush1.msra.mxu0 0.0
    %236 = vmatprep.subr.mxu0 0.0
    %237 = vmatpush1.msra.mxu0 0.0
    %238 = vmatprep.subr.mxu0 0.0
    %239 = vmatpush1.msra.mxu0 0.0
    %240 = vmatprep.subr.mxu0 0.0
    %241 = vmatpush1.msra.mxu0 0.0
    %242 = vmatprep.subr.mxu0 0.0
    %243 = vmatpush1.msra.mxu0 0.0
    %244 = vmatprep.subr.mxu0 0.0
    %245 = vmatpush1.msra.mxu0 0.0
    %246 = vmatprep.subr.mxu0 0.0
    %247 = vmatpush1.msra.mxu0 0.0
    %248 = vmatprep.subr.mxu0 0.0
    %249 = vmatpush1.msra.mxu0 0.0
    %250 = vmatprep.subr.mxu0 0.0
    %251 = vmatpush1.msra.mxu0 0.0
    %252 = vmatprep.subr.mxu0 0.0
    %253 = vmatpush1.msra.mxu0 0.0
    %254 = vmatprep.subr.mxu0 0.0
    %255 = vmatpush1.msra.mxu0 0.0
    %256 = vmatprep.subr.mxu0 0.0
    %257 = vmatpush1.msra.mxu0 0.0
    %258 = vmatprep.subr.mxu0 0.0
    %259 = vmatpush1.msra.mxu0 0.0
    %260 = vmatprep.subr.mxu0 0.0
    %261 = vmatpush1.msra.mxu0 0.0
    %262 = vmatprep.subr.mxu0 0.0
    %263 = vmatpush1.msra.mxu0 0.0
    %264 = vmatprep.subr.mxu0 0.0
    %265 = vmatpush1.msra.mxu0 0.0
    %266 = vmatprep.subr.mxu0 0.0
    %267 = vmatpush1.msra.mxu0 0.0
    %268 = vmatprep.subr.mxu0 0.0
    %269 = vmatpush1.msra.mxu0 0.0
    %270 = vmatprep.subr.mxu0 0.0
    %271 = vmatpush1.msra.mxu0 0.0
    %272 = vmatprep.subr.mxu0 0.0
    %273 = vmatpush1.msra.mxu0 0.0
    %274 = vmatprep.subr.mxu0 0.0
    %275 = vmatpush1.msra.mxu0 0.0
    %276 = vmatprep.subr.mxu0 0.0
    %277 = vmatpush1.msra.mxu0 0.0
    %278 = vmatprep.subr.mxu0 0.0
    %279 = vmatpush1.msra.mxu0 0.0
    %280 = vmatprep.mubr.f32.mxu0 0.0
    %281 = vmatmul.mubr.f32.gmra.mrb[0].mxu0 %v52
    %v282 = vpop.f32.mrb[0].mxu0
    %v283 = vadd.f32 %v49, %v282
    %v284 = vpop.f32.mrb[0].mxu0
    %285 = vdwg.mxu0
    %v286 = vmax.f32 %v283, 0.0
    %s287 = scalar_lea.vmem [#allocation10], 8
    %288 = vst [vmem:[%s287] sm:$0xff] %v286
    %289 = vmatprep.subr.mxu0 0.0
    %290 = vmatpush1.msra.mxu0 %v286
    %291 = vmatprep.subr.mxu0 0.0
    %292 = vmatpush1.msra.mxu0 0.0
    %293 = vmatprep.subr.mxu0 0.0
    %294 = vmatpush1.msra.mxu0 0.0
    %295 = vmatprep.subr.mxu0 0.0
    %296 = vmatpush1.msra.mxu0 0.0
    %297 = vmatprep.subr.mxu0 0.0
    %298 = vmatpush1.msra.mxu0 0.0
    %299 = vmatprep.subr.mxu0 0.0
    %300 = vmatpush1.msra.mxu0 0.0
    %301 = vmatprep.subr.mxu0 0.0
    %302 = vmatpush1.msra.mxu0 0.0
    %303 = vmatprep.subr.mxu0 0.0
    %304 = vmatpush1.msra.mxu0 0.0
    %305 = vmatprep.subr.mxu0 0.0
    %306 = vmatpush1.msra.mxu0 0.0
    %307 = vmatprep.subr.mxu0 0.0
    %308 = vmatpush1.msra.mxu0 0.0
    %309 = vmatprep.subr.mxu0 0.0
    %310 = vmatpush1.msra.mxu0 0.0
    %311 = vmatprep.subr.mxu0 0.0
    %312 = vmatpush1.msra.mxu0 0.0
    %313 = vmatprep.subr.mxu0 0.0
    %314 = vmatpush1.msra.mxu0 0.0
    %315 = vmatprep.subr.mxu0 0.0
    %316 = vmatpush1.msra.mxu0 0.0
    %317 = vmatprep.subr.mxu0 0.0
    %318 = vmatpush1.msra.mxu0 0.0
    %319 = vmatprep.subr.mxu0 0.0
    %320 = vmatpush1.msra.mxu0 0.0
    %321 = vmatprep.subr.mxu0 0.0
    %322 = vmatpush1.msra.mxu0 0.0
    %323 = vmatprep.subr.mxu0 0.0
    %324 = vmatpush1.msra.mxu0 0.0
    %325 = vmatprep.subr.mxu0 0.0
    %326 = vmatpush1.msra.mxu0 0.0
    %327 = vmatprep.subr.mxu0 0.0
    %328 = vmatpush1.msra.mxu0 0.0
    %329 = vmatprep.subr.mxu0 0.0
    %330 = vmatpush1.msra.mxu0 0.0
    %331 = vmatprep.subr.mxu0 0.0
    %332 = vmatpush1.msra.mxu0 0.0
    %333 = vmatprep.subr.mxu0 0.0
    %334 = vmatpush1.msra.mxu0 0.0
    %335 = vmatprep.subr.mxu0 0.0
    %336 = vmatpush1.msra.mxu0 0.0
    %337 = vmatprep.subr.mxu0 0.0
    %338 = vmatpush1.msra.mxu0 0.0
    %339 = vmatprep.subr.mxu0 0.0
    %340 = vmatpush1.msra.mxu0 0.0
    %341 = vmatprep.subr.mxu0 0.0
    %342 = vmatpush1.msra.mxu0 0.0
    %343 = vmatprep.subr.mxu0 0.0
    %344 = vmatpush1.msra.mxu0 0.0
    %345 = vmatprep.subr.mxu0 0.0
    %346 = vmatpush1.msra.mxu0 0.0
    %347 = vmatprep.subr.mxu0 0.0
    %348 = vmatpush1.msra.mxu0 0.0
    %349 = vmatprep.subr.mxu0 0.0
    %350 = vmatpush1.msra.mxu0 0.0
    %351 = vmatprep.subr.mxu0 0.0
    %352 = vmatpush1.msra.mxu0 0.0
    %353 = vmatprep.mubr.f32.mxu0 0.0
    %354 = vmatmul.mubr.f32.gmra.mrb[0].mxu0 %v138
    %v355 = vpop.f32.mrb[0].mxu0
    %v356 = vadd.f32 %v133, %v355
    %v357 = vpop.f32.mrb[0].mxu0
    %358 = vdwg.mxu0
    %s359 = scalar_lea.vmem [#allocation8], 4
    %360 = vst [vmem:[%s359] sm:$0xf] %v356
    %v361 = vld [vmem:[#allocation10] sm:$0xff]
    %v362 = vld [vmem:[#allocation10 + $0x8] sm:$0xff]
    %363 = vadd.xlane.f32.xlu0 %v361
    %v364 = vpop.xlane.xlu0 %363
    %365 = vadd.xlane.f32.xlu0 %v362
    %v366 = vpop.xlane.xlu0 %365
    %v367 = vlaneseq
    %v368 = vshrl.u32 %v367, 7
    %v369 = vsub.s32 0, %v368
    %v370 = vrot.slane %v44, %v369
    %v373 = vlaneseq
    %v374 = vand.u32 %v373, 127
    %v375 = vlaneseq
    %v376 = vshrl.u32 %v375, 7
    %v377 = vsub.s32 %v374, %v376
    %v378 = vrot.slane %v364, %v377
    %v379 = vlaneseq
    %v380 = vshrl.u32 %v379, 7
    %v381 = vsub.s32 %v374, %v380
    %v382 = vrot.slane %v366, %v381
    %vm383 = vcmask 1041409
    %v384 = vsel %vm383, %v382, %v378
    %385 = vrot.lane.b32.xlu0 %v42, 116
    %v386 = vpop.permute.xlu0 %385
    %389 = vrot.lane.b32.xlu0 %v370, 111
    %v390 = vpop.permute.xlu0 %389
    %v392 = vsel %vm137, %v384, 0
    %394 = vmatprep.subr.mxu0 0.0
    %395 = vmatpush1.msra.mxu0 %v386
    %396 = vmatprep.subr.mxu0 0.0
    %397 = vmatpush1.msra.mxu0 0.0
    %398 = vmatprep.subr.mxu0 0.0
    %399 = vmatpush1.msra.mxu0 0.0
    %400 = vmatprep.subr.mxu0 0.0
    %401 = vmatpush1.msra.mxu0 0.0
    %402 = vmatprep.subr.mxu0 0.0
    %403 = vmatpush1.msra.mxu0 0.0
    %404 = vmatprep.subr.mxu0 0.0
    %405 = vmatpush1.msra.mxu0 0.0
    %406 = vmatprep.subr.mxu0 0.0
    %407 = vmatpush1.msra.mxu0 0.0
    %408 = vmatprep.subr.mxu0 0.0
    %409 = vmatpush1.msra.mxu0 0.0
    %410 = vmatprep.subr.mxu0 0.0
    %411 = vmatpush1.msra.mxu0 0.0
    %412 = vmatprep.subr.mxu0 0.0
    %413 = vmatpush1.msra.mxu0 0.0
    %414 = vmatprep.subr.mxu0 0.0
    %415 = vmatpush1.msra.mxu0 0.0
    %416 = vmatprep.subr.mxu0 0.0
    %417 = vmatpush1.msra.mxu0 0.0
    %418 = vmatprep.subr.mxu0 0.0
    %419 = vmatpush1.msra.mxu0 0.0
    %420 = vmatprep.subr.mxu0 0.0
    %421 = vmatpush1.msra.mxu0 0.0
    %422 = vmatprep.subr.mxu0 0.0
    %423 = vmatpush1.msra.mxu0 0.0
    %424 = vmatprep.subr.mxu0 0.0
    %425 = vmatpush1.msra.mxu0 0.0
    %426 = vmatprep.subr.mxu0 0.0
    %427 = vmatpush1.msra.mxu0 0.0
    %428 = vmatprep.subr.mxu0 0.0
    %429 = vmatpush1.msra.mxu0 0.0
    %430 = vmatprep.subr.mxu0 0.0
    %431 = vmatpush1.msra.mxu0 0.0
    %432 = vmatprep.subr.mxu0 0.0
    %433 = vmatpush1.msra.mxu0 0.0
    %434 = vmatprep.subr.mxu0 0.0
    %435 = vmatpush1.msra.mxu0 0.0
    %436 = vmatprep.subr.mxu0 0.0
    %437 = vmatpush1.msra.mxu0 0.0
    %438 = vmatprep.subr.mxu0 0.0
    %439 = vmatpush1.msra.mxu0 0.0
    %440 = vmatprep.subr.mxu0 0.0
    %441 = vmatpush1.msra.mxu0 0.0
    %442 = vmatprep.subr.mxu0 0.0
    %443 = vmatpush1.msra.mxu0 0.0
    %444 = vmatprep.subr.mxu0 0.0
    %445 = vmatpush1.msra.mxu0 0.0
    %446 = vmatprep.subr.mxu0 0.0
    %447 = vmatpush1.msra.mxu0 0.0
    %448 = vmatprep.subr.mxu0 0.0
    %449 = vmatpush1.msra.mxu0 0.0
    %450 = vmatprep.subr.mxu0 0.0
    %451 = vmatpush1.msra.mxu0 0.0
    %452 = vmatprep.subr.mxu0 0.0
    %453 = vmatpush1.msra.mxu0 0.0
    %454 = vmatprep.subr.mxu0 0.0
    %455 = vmatpush1.msra.mxu0 0.0
    %456 = vmatprep.subr.mxu0 0.0
    %457 = vmatpush1.msra.mxu0 0.0
    %458 = vmatprep.mubr.f32.mxu0 0.0
    %459 = vmatmul.mubr.f32.gmra.mrb[0].mxu0 %v392
    %v460 = vpop.f32.mrb[0].mxu0
    %v461 = vadd.f32 %v390, %v460
    %v462 = vpop.f32.mrb[0].mxu0
    %463 = vdwg.mxu0
    %vm464 = vcmask 17408
    %465 = vst.msk [vmem:[#allocation7] sm:$0x3] %vm464, %v461
    // Predicated region
    $region18: #{tpu_custom_call.1} parent=1 // pred_check
      _
    $region19: #{tpu_custom_call.1} parent=1 // pred_check_branch
      %467 = sbr.rel (0) target = $region21
    $region20: #{tpu_custom_call.1} parent=1 // pred_region
      %s469 = ssub.s32 32, 32
      %470 = vsyncadd [#allocation4], %s469
      %s472 = sshll.u32 [#allocation7], 4
      %s473 = int_to_ptr.vmem [resolvable:$true] %s472
      %475 = dma.vmem_to_hbm [thread:$0]  %s473, 32, %s2, [#allocation4]
    $region21: #{tpu_custom_call.1} parent=1 // pred_fallthru
      _
    // Predicated region
    $region22: #{tpu_custom_call.1} parent=1 // pred_check
      _
    $region23: #{tpu_custom_call.1} parent=1 // pred_check_branch
      %477 = sbr.rel (0) target = $region25
    $region24: #{tpu_custom_call.1} parent=1 // pred_region
      %s479 = ssub.s32 128, 128
      %480 = vsyncadd [#allocation9], %s479
      %s481 = sshll.u32 [#allocation8], 4
      %s482 = int_to_ptr.vmem [resolvable:$true] %s481
      %487 = dma.vmem_to_hbm [thread:$0]  %s482, 128, %s3, [#allocation9], 64, 64, 4
    $region25: #{tpu_custom_call.1} parent=1 // pred_fallthru
      _
    // Predicated region
    $region26: #{tpu_custom_call.1} parent=1 // pred_check
      _
    $region27: #{tpu_custom_call.1} parent=1 // pred_check_branch
      %489 = sbr.rel (0) target = $region29
    $region28: #{tpu_custom_call.1} parent=1 // pred_region
      %s491 = ssub.s32 256, 256
      %492 = vsyncadd [#allocation9], %s491
      %s493 = sshll.u32 [#allocation10], 4
      %s494 = int_to_ptr.vmem [resolvable:$true] %s493
      %499 = dma.vmem_to_hbm [thread:$0]  %s494, 256, %s4, [#allocation9], 128, 128, 8
    $region29: #{tpu_custom_call.1} parent=1 // pred_fallthru
      _
    // Predicated region
    $region30: #{tpu_custom_call.1} parent=1 // pred_check
      _
    $region31: #{tpu_custom_call.1} parent=1 // pred_check_branch
      %501 = sbr.rel (0) target = $region33
    $region32: #{tpu_custom_call.1} parent=1 // pred_region
      %502 = dma.done [#allocation4], 32
    $region33: #{tpu_custom_call.1} parent=1 // pred_fallthru
      _
    // Predicated region
    $region34: #{tpu_custom_call.1} parent=1 // pred_check
      _
    $region35: #{tpu_custom_call.1} parent=1 // pred_check_branch
      %504 = sbr.rel (0) target = $region37
    $region36: #{tpu_custom_call.1} parent=1 // pred_region
      %505 = dma.done [#allocation9], 128
    $region37: #{tpu_custom_call.1} parent=1 // pred_fallthru
      _
    // Predicated region
    $region38: #{tpu_custom_call.1} parent=1 // pred_check
      _
    $region39: #{tpu_custom_call.1} parent=1 // pred_check_branch
      %507 = sbr.rel (0) target = $region41
    $region40: #{tpu_custom_call.1} parent=1 // pred_region
      %508 = dma.done [#allocation9], 256
    $region41: #{tpu_custom_call.1} parent=1 // pred_fallthru
      _
    %509 = vsyncpa [#allocation3], 1
    %510 = vsyncpa [#allocation6], 1
    %511 = vsyncpa [#allocation4], 1
    %512 = vsyncpa [#allocation9], 1

</llo_original>
